<compile_context>
chip_gen: v7x
topology: tpu7x:2x2x1
jax: 0.10.0
libtpu: 0.0.40
codegen_flags: <defaults>
</compile_context>

<pallas_src>
import functools
import math

import jax
import jax.numpy as jnp
from jax.experimental import pallas as pl
from jax.experimental.pallas import tpu as pltpu


def _round_up(x, m):
    return ((x + m - 1) // m) * m


# --------------------------- Pallas kernels ---------------------------------

def _epilogue(acc, s_ref, c_ref, r_ref, o_ref, relu):
    out = acc * s_ref[...] + c_ref[...]
    if r_ref is not None:
        out = out + r_ref[...].astype(jnp.float32)
    if relu:
        out = jnp.maximum(out, 0.0)
    o_ref[...] = out.astype(o_ref.dtype)


def _mm_single_k_kernel(a_ref, b_ref, s_ref, c_ref, *rest, relu, has_residual):
    """Single K-step matmul: no accumulator scratch, no init/finalize branches."""
    if has_residual:
        r_ref, o_ref = rest
    else:
        (o_ref,) = rest
        r_ref = None
    acc = jnp.dot(a_ref[...], b_ref[...], preferred_element_type=jnp.float32)
    _epilogue(acc, s_ref, c_ref, r_ref, o_ref, relu)


def _mm_multi_k_kernel(a_ref, b_ref, s_ref, c_ref, *rest, relu, has_residual):
    """K-tiled matmul with VMEM f32 accumulator and fused BN/residual/ReLU epilogue."""
    if has_residual:
        r_ref, o_ref, acc_ref = rest
    else:
        o_ref, acc_ref = rest
        r_ref = None

    @pl.when(pl.program_id(2) == 0)
    def _():
        acc_ref[...] = jnp.zeros_like(acc_ref)

    acc_ref[...] += jnp.dot(a_ref[...], b_ref[...],
                            preferred_element_type=jnp.float32)

    @pl.when(pl.program_id(2) == pl.num_programs(2) - 1)
    def _():
        _epilogue(acc_ref[...], s_ref, c_ref, r_ref, o_ref, relu)


def matmul_bn_act(a, b, scale, bias, *, relu, residual=None,
                  out_dtype=jnp.bfloat16):
    """out[m, n] = act((a @ b)[m, n] * scale[n] + bias[n] (+ residual[m, n])).

    a: (M, K) any float dtype (cast to bf16); b: (Kp0, Np) pre-packed bf16 with
    Kp0 >= K, Np % 128 == 0; scale/bias: (1, Np) f32; residual: (M, Np) or None.
    """
    M, K = a.shape
    Kp0, Np = b.shape

    # --- tile selection ------------------------------------------------------
    tm = min(256, _round_up(M, 16))            # 16-aligned sublanes for bf16 tiles
    Mp = _round_up(M, tm)

    cap_k = 2048
    n_k = -(-Kp0 // cap_k)
    tk = _round_up(-(-Kp0 // n_k), 128)
    Kp = tk * n_k

    if Mp // tm >= 2:
        tn = min(256, Np)
    elif Np >= 256:
        tn = min(512, Np // 2)                 # >=2 N-tiles when M collapses (dual-TC)
    else:
        tn = Np
    if Np % tn:
        tn = 128

    # --- operand padding (only when actually required) -----------------------
    a_p = a.astype(jnp.bfloat16)
    if Mp > M or Kp > K:
        a_p = jnp.pad(a_p, ((0, Mp - M), (0, Kp - K)))
    b_p = b if Kp == Kp0 else jnp.pad(b, ((0, Kp - Kp0), (0, 0)))

    operands = [a_p, b_p, scale, bias]
    in_specs = [
        pl.BlockSpec((tm, tk), lambda i, j, k: (i, k)),
        pl.BlockSpec((tk, tn), lambda i, j, k: (k, j)),
        pl.BlockSpec((1, tn), lambda i, j, k: (0, j)),
        pl.BlockSpec((1, tn), lambda i, j, k: (0, j)),
    ]

    has_residual = residual is not None
    if has_residual:
        r_p = residual.astype(jnp.bfloat16)
        if Mp > M:
            r_p = jnp.pad(r_p, ((0, Mp - M), (0, 0)))
        operands.append(r_p)
        in_specs.append(pl.BlockSpec((tm, tn), lambda i, j, k: (i, j)))

    if n_k == 1:
        kernel = functools.partial(_mm_single_k_kernel, relu=relu,
                                   has_residual=has_residual)
        scratch = []
    else:
        kernel = functools.partial(_mm_multi_k_kernel, relu=relu,
                                   has_residual=has_residual)
        scratch = [pltpu.VMEM((tm, tn), jnp.float32)]

    out = pl.pallas_call(
        kernel,
        out_shape=jax.ShapeDtypeStruct((Mp, Np), out_dtype),
        grid_spec=pltpu.PrefetchScalarGridSpec(
            num_scalar_prefetch=0,
            grid=(Mp // tm, Np // tn, n_k),
            in_specs=in_specs,
            out_specs=pl.BlockSpec((tm, tn), lambda i, j, k: (i, j)),
            scratch_shapes=scratch,
        ),
        compiler_params=pltpu.CompilerParams(
            dimension_semantics=("parallel", "parallel", "arbitrary")),
    )(*operands)
    if Mp > M:
        out = out[:M]
    return out


def _maxpool_kernel(x_ref, o_ref):
    o_ref[...] = jnp.max(x_ref[...], axis=0)


def maxpool_3x3_s2_p1(x):
    """MaxPool2d(kernel=3, stride=2, padding=1) on NHWC (channel dim lane-aligned)."""
    n, h, w, c = x.shape
    k, stride, pad = 3, 2, 1
    ho = (h + 2 * pad - k) // stride + 1
    wo = (w + 2 * pad - k) // stride + 1
    neg = jnp.finfo(x.dtype).min
    xp = jnp.pad(x, ((0, 0), (pad, pad), (pad, pad), (0, 0)),
                 constant_values=neg)
    patches = [xp[:, i:i + stride * ho:stride, j:j + stride * wo:stride, :]
               for i in range(k) for j in range(k)]
    stacked = jnp.stack(patches, axis=0).reshape(k * k, n * ho * wo, c)
    m = n * ho * wo
    tm = min(256, _round_up(m, 16))
    mp = _round_up(m, tm)
    if mp > m:
        stacked = jnp.pad(stacked, ((0, 0), (0, mp - m), (0, 0)),
                          constant_values=neg)
    out = pl.pallas_call(
        _maxpool_kernel,
        out_shape=jax.ShapeDtypeStruct((mp, c), x.dtype),
        grid=(mp // tm,),
        in_specs=[pl.BlockSpec((k * k, tm, c), lambda i: (0, i, 0))],
        out_specs=pl.BlockSpec((tm, c), lambda i: (i, 0)),
    )(stacked)
    return out[:m].reshape(n, ho, wo, c)


def _avgpool_kernel(x_ref, o_ref):
    o_ref[...] = jnp.mean(x_ref[...].astype(jnp.float32), axis=1).astype(o_ref.dtype)


def global_avg_pool(x):
    """AdaptiveAvgPool2d((1,1)) on NHWC -> [N, C], tiled over channels."""
    n, h, w, c = x.shape
    hw = h * w
    tc = min(512, c)
    if c % tc:
        tc = 128
    return pl.pallas_call(
        _avgpool_kernel,
        out_shape=jax.ShapeDtypeStruct((n, c), jnp.bfloat16),
        grid=(c // tc,),
        in_specs=[pl.BlockSpec((n, hw, tc), lambda i: (0, 0, i))],
        out_specs=pl.BlockSpec((n, tc), lambda i: (0, i)),
    )(x.reshape(n, hw, c))


# --------------------------- Conv = im2col + fused matmul --------------------

def conv2d_bn_act(x, p, *, stride, padding, relu, residual=None):
    """x: NHWC (channels already padded/lane-aligned); p: pre-packed conv params.

    Output channel dim = p["w"].shape[1] (padded to a multiple of 128); extra
    channels are exactly zero by construction (zero weight columns, zero
    scale/bias, zero residual lanes).
    """
    n, h, wd, c_act = x.shape
    kh, kw = p["kh"], p["kw"]
    _, np_out = p["w"].shape
    ho = (h + 2 * padding - kh) // stride + 1
    wo = (wd + 2 * padding - kw) // stride + 1

    if kh == 1 and kw == 1 and padding == 0:
        a = x[:, ::stride, ::stride, :].reshape(n * ho * wo, c_act)
    else:
        xp = jnp.pad(x, ((0, 0), (padding, padding), (padding, padding), (0, 0)))
        patches = [xp[:, i:i + stride * ho:stride, j:j + stride * wo:stride, :]
                   for i in range(kh) for j in range(kw)]
        a = jnp.concatenate(patches, axis=-1).reshape(n * ho * wo, kh * kw * c_act)

    r2d = None
    if residual is not None:
        r2d = residual.reshape(n * ho * wo, np_out)

    out = matmul_bn_act(a, p["w"], p["s"], p["b"], relu=relu,
                        residual=r2d, out_dtype=jnp.bfloat16)
    return out.reshape(n, ho, wo, np_out)


# --------------------------- Parameters --------------------------------------

def make_resnet50_params(key, num_input_channels=1, num_outputs=1):
    keys = iter(jax.random.split(key, 128))

    def conv(cout, cin, kh, kw, cin_stored):
        """Random conv weight + folded-BN, pre-packed into matmul layout."""
        std = (2.0 / (cin * kh * kw)) ** 0.5
        w = jax.random.normal(next(keys), (cout, cin, kh, kw), jnp.float32) * std
        # Folded (inference-mode) BatchNorm: gamma=1, beta=0, mean=0, var=1.
        eps = 1e-5
        scale = jnp.ones((cout,), jnp.float32) / jnp.sqrt(1.0 + eps)
        bias = jnp.zeros((cout,), jnp.float32)

        cout_p = _round_up(cout, 128)
        wt = jnp.transpose(w, (2, 3, 1, 0))                      # (kh, kw, cin, cout)
        wt = jnp.pad(wt, ((0, 0), (0, 0),
                          (0, cin_stored - cin), (0, cout_p - cout)))
        k_raw = kh * kw * cin_stored
        kp = _round_up(k_raw, 128)
        wp = wt.reshape(k_raw, cout_p)
        if kp > k_raw:
            wp = jnp.pad(wp, ((0, kp - k_raw), (0, 0)))
        return {
            "w": wp.astype(jnp.bfloat16),                        # (Kp, Np)
            "s": jnp.pad(scale, (0, cout_p - cout)).reshape(1, cout_p),
            "b": jnp.pad(bias, (0, cout_p - cout)).reshape(1, cout_p),
            "kh": kh, "kw": kw,
        }

    params = {"conv1": conv(64, num_input_channels, 7, 7, num_input_channels)}

    layers = []
    stored = 128                                   # stem output: 64 ch padded to 128
    inplanes = 64
    for planes, n_blocks, stride in [(64, 3, 1), (128, 4, 2), (256, 6, 2), (512, 3, 2)]:
        blocks = []
        planes_stored = _round_up(planes, 128)
        for bi in range(n_blocks):
            s = stride if bi == 0 else 1
            blk = {
                "stride": s,
                "conv1": conv(planes, inplanes, 1, 1, stored),
                "conv2": conv(planes, planes, 3, 3, planes_stored),
                "conv3": conv(planes * 4, planes, 1, 1, planes_stored),
            }
            if bi == 0:  # torchvision adds downsample when stride!=1 or channels change
                blk["down"] = conv(planes * 4, inplanes, 1, 1, stored)
            blocks.append(blk)
            inplanes = planes * 4
            stored = _round_up(planes * 4, 128)
        layers.append(blocks)
    params["layers"] = layers

    fc_w = jax.random.normal(next(keys), (num_outputs, 2048), jnp.float32) * 0.02
    fc_b = jax.random.normal(next(keys), (num_outputs,), jnp.float32) * 0.02
    n_p = _round_up(num_outputs, 128)
    params["fc"] = {
        "w": jnp.pad(fc_w.T, ((0, 0), (0, n_p - num_outputs))).astype(jnp.bfloat16),
        "s": jnp.ones((1, n_p), jnp.float32),
        "b": jnp.pad(fc_b, (0, n_p - num_outputs)).reshape(1, n_p),
        "n_out": num_outputs,
    }
    return params


# --------------------------- Forward ------------------------------------------

def resnet50_forward(params, x_nchw):
    """Input: NCHW (PyTorch convention). Output: [N, num_outputs] f32 logits."""
    x = jnp.transpose(x_nchw, (0, 2, 3, 1)).astype(jnp.bfloat16)   # -> NHWC bf16

    x = conv2d_bn_act(x, params["conv1"], stride=2, padding=3, relu=True)
    x = maxpool_3x3_s2_p1(x)

    for layer in params["layers"]:
        for blk in layer:
            identity = x
            if "down" in blk:
                identity = conv2d_bn_act(x, blk["down"], stride=blk["stride"],
                                         padding=0, relu=False)
            out = conv2d_bn_act(x, blk["conv1"], stride=1, padding=0, relu=True)
            out = conv2d_bn_act(out, blk["conv2"], stride=blk["stride"],
                                padding=1, relu=True)
            # conv3 + BN + residual add + ReLU fused in one matmul epilogue
            x = conv2d_bn_act(out, blk["conv3"], stride=1, padding=0,
                              relu=True, residual=identity)

    pooled = global_avg_pool(x)                                    # [N, 2048] bf16
    fc = params["fc"]
    logits = matmul_bn_act(pooled, fc["w"], fc["s"], fc["b"],
                           relu=False, out_dtype=jnp.float32)
    return logits[:, :fc["n_out"]]


# --------------------------- Main ---------------------------------------------

if __name__ == "__main__":
    key = jax.random.PRNGKey(0)
    k_param, k_x = jax.random.split(key)

    # ResNet50(num_input_channels=1, num_outputs=1); 32x32 spatial survives the
    # 32x total downsampling (final feature map is 1x1).
    x = jax.random.normal(k_x, (2, 1, 32, 32), jnp.float32)   # NCHW like PyTorch
    params = make_resnet50_params(k_param, num_input_channels=1, num_outputs=1)

    y = resnet50_forward(params, x)
    y = jax.block_until_ready(y)
    assert y.shape == (2, 1), y.shape
    assert bool(jnp.all(jnp.isfinite(y)))
    print("KERNEL_OK")
</pallas_src>

<mosaic_0001>
module attributes {stable_mosaic.version = 11 : i64} {
  func.func @_mm_single_k_kernel(%arg0: i32, %arg1: i32, %arg2: i32, %arg3: memref<256x128xbf16, #tpu.memory_space<vmem>>, %arg4: memref<128x128xbf16, #tpu.memory_space<vmem>>, %arg5: memref<1x128xf32, #tpu.memory_space<vmem>>, %arg6: memref<1x128xf32, #tpu.memory_space<vmem>>, %arg7: memref<256x128xbf16, #tpu.memory_space<vmem>>) attributes {dimension_semantics = [#tpu.dimension_semantics<parallel>, #tpu.dimension_semantics<parallel>, #tpu.dimension_semantics<arbitrary>], iteration_bounds = array<i64: 2, 1, 1>, scalar_prefetch = 0 : i64, scratch_operands = 0 : i64, tpu.core_type = #tpu.core_type<tc>, window_params = [{transform_indices = @transform_0, window_bounds = array<i64: 256, 128>}, {transform_indices = @transform_1, window_bounds = array<i64: 128, 128>}, {transform_indices = @transform_2, window_bounds = array<i64: 1, 128>}, {transform_indices = @transform_3, window_bounds = array<i64: 1, 128>}, {transform_indices = @transform_4, window_bounds = array<i64: 256, 128>}]} {
    %c0 = arith.constant 0 : index
    %c0_0 = arith.constant 0 : index
    %0 = vector.load %arg3[%c0, %c0_0] : memref<256x128xbf16, #tpu.memory_space<vmem>>, vector<256x128xbf16>
    %c0_1 = arith.constant 0 : index
    %c0_2 = arith.constant 0 : index
    %1 = vector.load %arg4[%c0_1, %c0_2] : memref<128x128xbf16, #tpu.memory_space<vmem>>, vector<128x128xbf16>
    %cst = arith.constant dense<0.000000e+00> : vector<256x128xf32>
    %2 = tpu.matmul %0, %1, %cst {dimension_numbers = #tpu.dot_dimension_numbers<[1], [0], [0], [1], [0, 0, 1, 1], [], []>} : vector<256x128xbf16>, vector<128x128xbf16>, vector<256x128xf32> -> vector<256x128xf32>
    %c0_3 = arith.constant 0 : index
    %c0_4 = arith.constant 0 : index
    %3 = vector.load %arg5[%c0_3, %c0_4] : memref<1x128xf32, #tpu.memory_space<vmem>>, vector<1x128xf32>
    %4 = vector.broadcast %3 : vector<1x128xf32> to vector<256x128xf32>
    %5 = arith.mulf %2, %4 : vector<256x128xf32>
    %c0_5 = arith.constant 0 : index
    %c0_6 = arith.constant 0 : index
    %6 = vector.load %arg6[%c0_5, %c0_6] : memref<1x128xf32, #tpu.memory_space<vmem>>, vector<1x128xf32>
    %7 = vector.broadcast %6 : vector<1x128xf32> to vector<256x128xf32>
    %8 = arith.addf %5, %7 : vector<256x128xf32>
    %cst_7 = arith.constant 0.000000e+00 : f32
    %9 = vector.broadcast %cst_7 : f32 to vector<256x128xf32>
    %10 = arith.maximumf %8, %9 : vector<256x128xf32>
    %11 = arith.truncf %10 : vector<256x128xf32> to vector<256x128xbf16>
    %c0_8 = arith.constant 0 : index
    %c0_9 = arith.constant 0 : index
    %12 = vector.load %arg7[%c0_8, %c0_9] : memref<256x128xbf16, #tpu.memory_space<vmem>>, vector<256x128xbf16>
    tpu.vector_store %arg7[%c0_8, %c0_9], %11 {strides = array<i32>} : memref<256x128xbf16, #tpu.memory_space<vmem>>, vector<256x128xbf16>,
    return
  }
  func.func @transform_0(%arg0: i32, %arg1: i32, %arg2: i32) -> (i32, i32) {
    %c0_i32 = arith.constant 0 : i32
    return %arg0, %arg2 : i32, i32
  }
  func.func @transform_1(%arg0: i32, %arg1: i32, %arg2: i32) -> (i32, i32) {
    %c0_i32 = arith.constant 0 : i32
    return %arg2, %arg1 : i32, i32
  }
  func.func @transform_2(%arg0: i32, %arg1: i32, %arg2: i32) -> (i32, i32) {
    %c0_i32 = arith.constant 0 : i32
    %c0_i32_0 = arith.constant 0 : i32
    return %c0_i32, %arg1 : i32, i32
  }
  func.func @transform_3(%arg0: i32, %arg1: i32, %arg2: i32) -> (i32, i32) {
    %c0_i32 = arith.constant 0 : i32
    %c0_i32_0 = arith.constant 0 : i32
    return %c0_i32, %arg1 : i32, i32
  }
  func.func @transform_4(%arg0: i32, %arg1: i32, %arg2: i32) -> (i32, i32) {
    %c0_i32 = arith.constant 0 : i32
    return %arg0, %arg1 : i32, i32
  }
}

</mosaic_0001>

<llo_original>
// kernel: tpu_custom_call.1
$region0: #{tpu_custom_call.1}
  #allocation0 [shape = 'u32[]', space=smem, size = 0x4, offset = 0x4, fixed_abs, tag = 'smem constant byte address 0x4 - core index']
  #allocation1 [shape = 'u32[144,128]{1,0:T(1,128)}', space=vmem, size = 0x12000, scoped, tag = 'internal scratch']
  %s0 = inlined_call_operand.hbm [shape: bf16[512,128], index: 0, kind: input, shape index: {}]
  %s1 = inlined_call_operand.hbm [shape: bf16[128,128], index: 1, kind: input, shape index: {}]
  %s2 = inlined_call_operand.vmem [shape: f32[1,128], index: 2, kind: input, shape index: {}]
  %s3 = inlined_call_operand.vmem [shape: f32[1,128], index: 3, kind: input, shape index: {}]
  %s4 = inlined_call_operand.hbm [shape: bf16[512,128], index: 4, kind: output, shape index: {}]
  %s5 = sld [smem:[#allocation0]]
  $region57: #{tpu_custom_call.1} parent=0
    _
  %s7 = ssub.s32 1, %s5
  %s8 = scalar_select 0, %s7, %s5
  $region1: #{tpu_custom_call.1} parent=0
    #allocation2 [shape = 'u8[131072]{0}', space=vmem, size = 0x20000, scoped, tag = 'input window, operand 0']
    #allocation3 [shape = 's32[2]{0}', space=sflag, size = 0x8, scoped, tag = 'scoped memory for tpu_custom_call.1']
    #allocation4 [shape = 's32[2]{0}', space=sflag, size = 0x8, scoped, tag = 'scoped memory for tpu_custom_call.1']
    #allocation5 [shape = 'u8[32768]{0}', space=vmem, size = 0x8000, scoped, tag = 'input window, operand 1, single buffered']
    #allocation6 [shape = 's32[1]{0}', space=sflag, size = 0x4, scoped, tag = 'scoped memory for tpu_custom_call.1']
    #allocation7 [shape = 'u8[131072]{0}', space=vmem, size = 0x20000, scoped, tag = 'output window, operand 0']
    %9 = vsyncpa [#allocation3], 0
    %s10 = scalar_lea.sflag [#allocation3], 1
    %11 = vsyncpa %s10, 0
    %12 = vsyncpa [#allocation6], 0
    %13 = vsyncpa [#allocation4], 0
    %s14 = scalar_lea.sflag [#allocation4], 1
    %15 = vsyncpa %s14, 0
    loop: start=0, step=1, limit=4
    $region2: #{tpu_custom_call.1} parent=1 // loop_pre_header
      _
    $region3: #{tpu_custom_call.1} parent=1 // loop_header
      %s17 = sphi 0, %s21
      %p18 = scmp.ge.s32.totalorder %s17, 4
      %s24 = sphi 0, %s43
      %s25 = sphi 0, %s39
      %s26 = sphi 0, %s35
      %s27 = sphi 0, %s24
      %s28 = sphi 0, %s25
      %s29 = sphi 0, %s26
      %s30 = sphi 0, %s27
      %s31 = sphi 0, %s28
      %s32 = sphi 0, %s29
      %s48 = sphi 0, %s50
      %s51 = sphi 0, %s48
      %s52 = sphi 0, %s51
      %s68 = sphi 0, %s52
      %s76 = sphi 0, %s78
      %s79 = sphi 0, %s76
      %s80 = sphi 0, %s79
      %s96 = sphi 0, %s80
      %s102 = sphi 0, %s104
      %s105 = sphi 0, %s102
      %s106 = sphi 0, %s105
      %s122 = sphi 0, %s106
      %s128 = sphi 0, %s130
      %s131 = sphi 0, %s128
      %s132 = sphi 0, %s131
      %s148 = sphi 0, %s132
      %s156 = sphi 0, %s158
      %s159 = sphi 0, %s156
      %s160 = sphi 0, %s159
      %s176 = sphi 0, %s160
    $region4: #{tpu_custom_call.1} parent=1 // loop_header_branch
      %20 = sbr.rel (%p18) target = $region8
    $region5: #{tpu_custom_call.1} parent=1 // loop_body
      %s22 = ssub.s32 %s17, 1
      %s23 = ssub.s32 %s17, 2
      %s33 = sadd.s32 1, %s26
      %p34 = scmp.ge.s32.totalorder %s33, 1
      %s35 = scalar_select %p34, 0, %s33
      %s36 = sadd.s32 1, %s25
      %s37 = scalar_select %p34, %s36, %s25
      %p38 = scmp.ge.s32.totalorder %s37, 1
      %s39 = scalar_select %p38, 0, %s37
      %s40 = sadd.s32 1, %s24
      %s41 = scalar_select %p38, %s40, %s24
      %p42 = scmp.ge.s32.totalorder %s41, 2
      %s43 = scalar_select %p42, 0, %s41
      %s44 = ssub.s32 %s24, %s43
      %s45 = ssub.s32 %s26, %s35
      %s46 = sor.u32 %s44, %s45
      %p47 = scmp.eq.s32.totalorder %s46, 0
      %s49 = sadd.s32 %s48, 1
      %s50 = scalar_select %p47, %s48, %s49
      %p53 = pneg %p47
      %p54 = scmp.eq.s32.totalorder %s17, 1
      %p55 = por %p53, %p54
      %p56 = scmp.ne.s32.totalorder %s48, %s51
      %p57 = scmp.eq.s32.totalorder %s17, 0
      %p58 = por %p56, %p57
      %p59 = scmp.ne.s32.totalorder %s48, %s51
      %p60 = scmp.eq.s32.totalorder %s22, 1
      %p61 = por %p59, %p60
      %p62 = scmp.ne.s32.totalorder %s51, %s52
      %p63 = scmp.eq.s32.totalorder %s22, 0
      %p64 = por %p62, %p63
      %p65 = scmp.ne.s32.totalorder %s51, %s52
      %p66 = scmp.eq.s32.totalorder %s23, 1
      %p67 = por %p65, %p66
      %p69 = scmp.ne.s32.totalorder %s52, %s68
      %p70 = scmp.eq.s32.totalorder %s23, 0
      %p71 = por %p69, %p70
      %s72 = ssub.s32 %s26, %s35
      %s73 = ssub.s32 %s25, %s39
      %s74 = sor.u32 %s72, %s73
      %p75 = scmp.eq.s32.totalorder %s74, 0
      %s77 = sadd.s32 %s76, 1
      %s78 = scalar_select %p75, %s76, %s77
      %p81 = pneg %p75
      %p82 = scmp.eq.s32.totalorder %s17, 1
      %p83 = por %p81, %p82
      %p84 = scmp.ne.s32.totalorder %s76, %s79
      %p85 = scmp.eq.s32.totalorder %s17, 0
      %p86 = por %p84, %p85
      %p87 = scmp.ne.s32.totalorder %s76, %s79
      %p88 = scmp.eq.s32.totalorder %s22, 1
      %p89 = por %p87, %p88
      %p90 = scmp.ne.s32.totalorder %s79, %s80
      %p91 = scmp.eq.s32.totalorder %s22, 0
      %p92 = por %p90, %p91
      %p93 = scmp.ne.s32.totalorder %s79, %s80
      %p94 = scmp.eq.s32.totalorder %s23, 1
      %p95 = por %p93, %p94
      %p97 = scmp.ne.s32.totalorder %s80, %s96
      %p98 = scmp.eq.s32.totalorder %s23, 0
      %p99 = por %p97, %p98
      %s100 = ssub.s32 %s25, %s39
      %p101 = scmp.eq.s32.totalorder %s100, 0
      %s103 = sadd.s32 %s102, 1
      %s104 = scalar_select %p101, %s102, %s103
      %p107 = pneg %p101
      %p108 = scmp.eq.s32.totalorder %s17, 1
      %p109 = por %p107, %p108
      %p110 = scmp.ne.s32.totalorder %s102, %s105
      %p111 = scmp.eq.s32.totalorder %s17, 0
      %p112 = por %p110, %p111
      %p113 = scmp.ne.s32.totalorder %s102, %s105
      %p114 = scmp.eq.s32.totalorder %s22, 1
      %p115 = por %p113, %p114
      %p116 = scmp.ne.s32.totalorder %s105, %s106
      %p117 = scmp.eq.s32.totalorder %s22, 0
      %p118 = por %p116, %p117
      %p119 = scmp.ne.s32.totalorder %s105, %s106
      %p120 = scmp.eq.s32.totalorder %s23, 1
      %p121 = por %p119, %p120
      %p123 = scmp.ne.s32.totalorder %s106, %s122
      %p124 = scmp.eq.s32.totalorder %s23, 0
      %p125 = por %p123, %p124
      %s126 = ssub.s32 %s25, %s39
      %p127 = scmp.eq.s32.totalorder %s126, 0
      %s129 = sadd.s32 %s128, 1
      %s130 = scalar_select %p127, %s128, %s129
      %p133 = pneg %p127
      %p134 = scmp.eq.s32.totalorder %s17, 1
      %p135 = por %p133, %p134
      %p136 = scmp.ne.s32.totalorder %s128, %s131
      %p137 = scmp.eq.s32.totalorder %s17, 0
      %p138 = por %p136, %p137
      %p139 = scmp.ne.s32.totalorder %s128, %s131
      %p140 = scmp.eq.s32.totalorder %s22, 1
      %p141 = por %p139, %p140
      %p142 = scmp.ne.s32.totalorder %s131, %s132
      %p143 = scmp.eq.s32.totalorder %s22, 0
      %p144 = por %p142, %p143
      %p145 = scmp.ne.s32.totalorder %s131, %s132
      %p146 = scmp.eq.s32.totalorder %s23, 1
      %p147 = por %p145, %p146
      %p149 = scmp.ne.s32.totalorder %s132, %s148
      %p150 = scmp.eq.s32.totalorder %s23, 0
      %p151 = por %p149, %p150
      %s152 = ssub.s32 %s24, %s43
      %s153 = ssub.s32 %s25, %s39
      %s154 = sor.u32 %s152, %s153
      %p155 = scmp.eq.s32.totalorder %s154, 0
      %s157 = sadd.s32 %s156, 1
      %s158 = scalar_select %p155, %s156, %s157
      %p161 = pneg %p155
      %p162 = scmp.eq.s32.totalorder %s17, 1
      %p163 = por %p161, %p162
      %p164 = scmp.ne.s32.totalorder %s156, %s159
      %p165 = scmp.eq.s32.totalorder %s17, 0
      %p166 = por %p164, %p165
      %p167 = scmp.ne.s32.totalorder %s156, %s159
      %p168 = scmp.eq.s32.totalorder %s22, 1
      %p169 = por %p167, %p168
      %p170 = scmp.ne.s32.totalorder %s159, %s160
      %p171 = scmp.eq.s32.totalorder %s22, 0
      %p172 = por %p170, %p171
      %p173 = scmp.ne.s32.totalorder %s159, %s160
      %p174 = scmp.eq.s32.totalorder %s23, 1
      %p175 = por %p173, %p174
      %p177 = scmp.ne.s32.totalorder %s160, %s176
      %p178 = scmp.eq.s32.totalorder %s23, 0
      %p179 = por %p177, %p178
      %p180 = scmp.le.s32.totalorder 1, %s17
      %p181 = scmp.lt.s32.totalorder %s17, 3
      %p182 = pnand %p180, %p181
      %p183 = pneg %p182
      // Predicated region
      $region9: #{tpu_custom_call.1} parent=5 // pred_check
        _
      $region10: #{tpu_custom_call.1} parent=5 // pred_check_branch
        %185 = sbr.rel (%p182) target = $region12
      $region11: #{tpu_custom_call.1} parent=5 // pred_region
        %s186 = ssub.s32 %s17, 1
        // Predicated region
        $region13: #{tpu_custom_call.1} parent=11 // pred_check
          %p187 = pneg %p92
        $region14: #{tpu_custom_call.1} parent=11 // pred_check_branch
          %189 = sbr.rel (%p187) target = $region16
        $region15: #{tpu_custom_call.1} parent=11 // pred_region
          %s190 = smul.u32 16, %s29
          %s192 = ssub.s32 1024, 1024
          %193 = vsyncadd [#allocation6], %s192
          %s194 = sadd.s32 %s28, %s190
          %s195 = smul.addr %s194, 64
          %s196 = scalar_lea.hbm %s1, %s195
          %s197 = sshll.u32 [#allocation5], 4
          %s198 = int_to_ptr.vmem [resolvable:$true] %s197
          %203 = dma.hbm_to_vmem [thread:$0]  %s196, 1024, %s198, [#allocation6], 64, 64, 4
        $region16: #{tpu_custom_call.1} parent=11 // pred_fallthru
          _
        // Predicated region
        $region17: #{tpu_custom_call.1} parent=11 // pred_check
          %p204 = pneg %p118
        $region18: #{tpu_custom_call.1} parent=11 // pred_check_branch
          %206 = sbr.rel (%p204) target = $region20
        $region19: #{tpu_custom_call.1} parent=11 // pred_region
          %p207 = scmp.lt.s32.totalorder %s28, 0
          %s208 = scalar_select %p207, %s28, 0
          %s209 = scalar_lea.vmem %s2, %s208
        $region20: #{tpu_custom_call.1} parent=11 // pred_fallthru
          _
        // Predicated region
        $region21: #{tpu_custom_call.1} parent=11 // pred_check
          %p210 = pneg %p144
        $region22: #{tpu_custom_call.1} parent=11 // pred_check_branch
          %212 = sbr.rel (%p210) target = $region24
        $region23: #{tpu_custom_call.1} parent=11 // pred_region
          %p213 = scmp.lt.s32.totalorder %s28, 0
          %s214 = scalar_select %p213, %s28, 0
          %s215 = scalar_lea.vmem %s3, %s214
        $region24: #{tpu_custom_call.1} parent=11 // pred_fallthru
          _
      $region12: #{tpu_custom_call.1} parent=5 // pred_fallthru
        _
      %p216 = scmp.lt.s32.totalorder %s17, 2
      // Predicated region
      $region25: #{tpu_custom_call.1} parent=5 // pred_check
        %p217 = pneg %p216
      $region26: #{tpu_custom_call.1} parent=5 // pred_check_branch
        %219 = sbr.rel (%p217) target = $region28
      $region27: #{tpu_custom_call.1} parent=5 // pred_region
        // Predicated region
        $region29: #{tpu_custom_call.1} parent=27 // pred_check
          %p220 = pneg %p58
        $region30: #{tpu_custom_call.1} parent=27 // pred_check_branch
          %222 = sbr.rel (%p220) target = $region32
        $region31: #{tpu_custom_call.1} parent=27 // pred_region
          %s223 = sand.u32 %s48, 1
          %s224 = scalar_lea.sflag [#allocation3], %s223
          %s225 = sand.u32 %s48, 1
          %s226 = smul.addr %s225, 128
          %s227 = scalar_lea.vmem [#allocation2], %s226
          %s228 = smul.u32 32, %s24
          %s230 = ssub.s32 2048, 2048
          %231 = vsyncadd %s224, %s230
          %s232 = sadd.s32 %s26, %s228
          %s233 = smul.addr %s232, 64
          %s234 = scalar_lea.hbm %s0, %s233
          %s235 = sshll.u32 %s227, 4
          %s236 = int_to_ptr.vmem [resolvable:$true] %s235
          %241 = dma.hbm_to_vmem [thread:$0]  %s234, 2048, %s236, %s224, 64, 64, 4
        $region32: #{tpu_custom_call.1} parent=27 // pred_fallthru
          _
      $region28: #{tpu_custom_call.1} parent=5 // pred_fallthru
        _
      %p242 = scmp.le.s32.totalorder 1, %s17
      %p243 = scmp.lt.s32.totalorder %s17, 3
      %p244 = pnand %p242, %p243
      %p245 = pneg %p244
      // Predicated region
      $region33: #{tpu_custom_call.1} parent=5 // pred_check
        _
      $region34: #{tpu_custom_call.1} parent=5 // pred_check_branch
        %247 = sbr.rel (%p244) target = $region36
      $region35: #{tpu_custom_call.1} parent=5 // pred_region
        %s248 = ssub.s32 %s17, 1
        %s249 = sand.u32 %s51, 1
        %s250 = scalar_lea.sflag [#allocation3], %s249
        %s251 = sand.u32 %s51, 1
        %s252 = smul.addr %s251, 128
        %s253 = scalar_lea.vmem [#allocation2], %s252
        // Predicated region
        $region37: #{tpu_custom_call.1} parent=35 // pred_check
          %p254 = pneg %p64
        $region38: #{tpu_custom_call.1} parent=35 // pred_check_branch
          %256 = sbr.rel (%p254) target = $region40
        $region39: #{tpu_custom_call.1} parent=35 // pred_region
          %257 = dma.done %s250, 2048
        $region40: #{tpu_custom_call.1} parent=35 // pred_fallthru
          _
        // Predicated region
        $region41: #{tpu_custom_call.1} parent=35 // pred_check
          %p258 = pneg %p92
        $region42: #{tpu_custom_call.1} parent=35 // pred_check_branch
          %260 = sbr.rel (%p258) target = $region44
        $region43: #{tpu_custom_call.1} parent=35 // pred_region
          %261 = dma.done [#allocation6], 1024
        $region44: #{tpu_custom_call.1} parent=35 // pred_fallthru
          _
        %s262 = sand.u32 %s51, 1
        %s263 = scalar_lea.sflag [#allocation3], %s262
        %s264 = sand.u32 %s51, 1
        %s265 = smul.addr %s264, 128
        %s266 = scalar_lea.vmem [#allocation2], %s265
        %p267 = pneg %p64
        %p268 = pneg %p61
        %p269 = pneg %p92
        %p270 = pneg %p89
        %p271 = scmp.lt.s32.totalorder %s28, 0
        %s272 = scalar_select %p271, %s28, 0
        %s273 = scalar_lea.vmem %s2, %s272
        %p274 = pneg %p118
        %p275 = pneg %p115
        %p276 = scmp.lt.s32.totalorder %s28, 0
        %s277 = scalar_select %p276, %s28, 0
        %s278 = scalar_lea.vmem %s3, %s277
        %p279 = pneg %p144
        %p280 = pneg %p141
        %p281 = pneg %p172
        %p282 = pneg %p169
        %s283 = sand.u32 %s159, 1
        %s284 = scalar_lea.sflag [#allocation4], %s283
        %s285 = sand.u32 %s159, 1
        %s286 = smul.addr %s285, 128
        %s287 = scalar_lea.vmem [#allocation7], %s286
        %s288 = smul.u32 32, %s27
        %s289 = smul.u32 16, %s29
        %p290 = scmp.lt.s32.totalorder %s28, 0
        %s291 = scalar_select %p290, %s28, 0
        %s292 = scalar_lea.vmem %s2, %s291
        %p293 = scmp.lt.s32.totalorder %s28, 0
        %s294 = scalar_select %p293, %s28, 0
        %s295 = scalar_lea.vmem %s3, %s294
        %s296 = smul.u32 32, %s27
        %v298 = vld [vmem:[%s253] sm:$0xf]
        %v299 = vld [vmem:[%s253 + $0x4] sm:$0xf]
        %v300 = vld [vmem:[%s253 + $0x8] sm:$0xf]
        %v301 = vld [vmem:[%s253 + $0xc] sm:$0xf]
        %v302 = vld [vmem:[%s253 + $0x10] sm:$0xf]
        %v303 = vld [vmem:[%s253 + $0x14] sm:$0xf]
        %v304 = vld [vmem:[%s253 + $0x18] sm:$0xf]
        %v305 = vld [vmem:[%s253 + $0x1c] sm:$0xf]
        %v306 = vld [vmem:[%s253 + $0x20] sm:$0xf]
        %v307 = vld [vmem:[%s253 + $0x24] sm:$0xf]
        %v308 = vld [vmem:[%s253 + $0x28] sm:$0xf]
        %v309 = vld [vmem:[%s253 + $0x2c] sm:$0xf]
        %v310 = vld [vmem:[%s253 + $0x30] sm:$0xf]
        %v311 = vld [vmem:[%s253 + $0x34] sm:$0xf]
        %v312 = vld [vmem:[%s253 + $0x38] sm:$0xf]
        %v313 = vld [vmem:[%s253 + $0x3c] sm:$0xf]
        %v314 = vld [vmem:[%s253 + $0x40] sm:$0xf]
        %v315 = vld [vmem:[%s253 + $0x44] sm:$0xf]
        %v316 = vld [vmem:[%s253 + $0x48] sm:$0xf]
        %v317 = vld [vmem:[%s253 + $0x4c] sm:$0xf]
        %v318 = vld [vmem:[%s253 + $0x50] sm:$0xf]
        %v319 = vld [vmem:[%s253 + $0x54] sm:$0xf]
        %v320 = vld [vmem:[%s253 + $0x58] sm:$0xf]
        %v321 = vld [vmem:[%s253 + $0x5c] sm:$0xf]
        %v322 = vld [vmem:[%s253 + $0x60] sm:$0xf]
        %v323 = vld [vmem:[%s253 + $0x64] sm:$0xf]
        %v324 = vld [vmem:[%s253 + $0x68] sm:$0xf]
        %v325 = vld [vmem:[%s253 + $0x6c] sm:$0xf]
        %v326 = vld [vmem:[%s253 + $0x70] sm:$0xf]
        %v327 = vld [vmem:[%s253 + $0x74] sm:$0xf]
        %v328 = vld [vmem:[%s253 + $0x78] sm:$0xf]
        %v329 = vld [vmem:[%s253 + $0x7c] sm:$0xf]
        %v330 = vld [vmem:[#allocation5] sm:$0xf]
        %v331 = vld [vmem:[#allocation5 + $0x4] sm:$0xf]
        %v332 = vld [vmem:[#allocation5 + $0x8] sm:$0xf]
        %v333 = vld [vmem:[#allocation5 + $0xc] sm:$0xf]
        %v334 = vld [vmem:[#allocation5 + $0x10] sm:$0xf]
        %v335 = vld [vmem:[#allocation5 + $0x14] sm:$0xf]
        %v336 = vld [vmem:[#allocation5 + $0x18] sm:$0xf]
        %v337 = vld [vmem:[#allocation5 + $0x1c] sm:$0xf]
        %v338 = vld [vmem:[#allocation5 + $0x20] sm:$0xf]
        %v339 = vld [vmem:[#allocation5 + $0x24] sm:$0xf]
        %v340 = vld [vmem:[#allocation5 + $0x28] sm:$0xf]
        %v341 = vld [vmem:[#allocation5 + $0x2c] sm:$0xf]
        %v342 = vld [vmem:[#allocation5 + $0x30] sm:$0xf]
        %v343 = vld [vmem:[#allocation5 + $0x34] sm:$0xf]
        %v344 = vld [vmem:[#allocation5 + $0x38] sm:$0xf]
        %v345 = vld [vmem:[#allocation5 + $0x3c] sm:$0xf]
        %v378 = vunpack.c.l.b16 %v298
        %v379 = vunpack.c.l.b16 %v299
        %v380 = vunpack.c.l.b16 %v300
        %v381 = vunpack.c.l.b16 %v301
        %v382 = vunpack.c.l.b16 %v302
        %v383 = vunpack.c.l.b16 %v303
        %v384 = vunpack.c.l.b16 %v304
        %v385 = vunpack.c.l.b16 %v305
        %v386 = vunpack.c.l.b16 %v306
        %v387 = vunpack.c.l.b16 %v307
        %v388 = vunpack.c.l.b16 %v308
        %v389 = vunpack.c.l.b16 %v309
        %v390 = vunpack.c.l.b16 %v310
        %v391 = vunpack.c.l.b16 %v311
        %v392 = vunpack.c.l.b16 %v312
        %v393 = vunpack.c.l.b16 %v313
        %v394 = vunpack.c.l.b16 %v314
        %v395 = vunpack.c.l.b16 %v315
        %v396 = vunpack.c.l.b16 %v316
        %v397 = vunpack.c.l.b16 %v317
        %v398 = vunpack.c.l.b16 %v318
        %v399 = vunpack.c.l.b16 %v319
        %v400 = vunpack.c.l.b16 %v320
        %v401 = vunpack.c.l.b16 %v321
        %v402 = vunpack.c.l.b16 %v322
        %v403 = vunpack.c.l.b16 %v323
        %v404 = vunpack.c.l.b16 %v324
        %v405 = vunpack.c.l.b16 %v325
        %v406 = vunpack.c.l.b16 %v326
        %v407 = vunpack.c.l.b16 %v327
        %v408 = vunpack.c.l.b16 %v328
        %v409 = vunpack.c.l.b16 %v329
        %v410 = vpack.c.b16 %v379, %v378
        %v411 = vpack.c.b16 %v381, %v380
        %v412 = vpack.c.b16 %v383, %v382
        %v413 = vpack.c.b16 %v385, %v384
        %v414 = vpack.c.b16 %v387, %v386
        %v415 = vpack.c.b16 %v389, %v388
        %v416 = vpack.c.b16 %v391, %v390
        %v417 = vpack.c.b16 %v393, %v392
        %v418 = vpack.c.b16 %v395, %v394
        %v419 = vpack.c.b16 %v397, %v396
        %v420 = vpack.c.b16 %v399, %v398
        %v421 = vpack.c.b16 %v401, %v400
        %v422 = vpack.c.b16 %v403, %v402
        %v423 = vpack.c.b16 %v405, %v404
        %v424 = vpack.c.b16 %v407, %v406
        %v425 = vpack.c.b16 %v409, %v408
        %v458 = vunpack.c.l.b16 %v330
        %v459 = vunpack.c.l.b16 %v331
        %v460 = vunpack.c.l.b16 %v332
        %v461 = vunpack.c.l.b16 %v333
        %v462 = vunpack.c.l.b16 %v334
        %v463 = vunpack.c.l.b16 %v335
        %v464 = vunpack.c.l.b16 %v336
        %v465 = vunpack.c.l.b16 %v337
        %v466 = vunpack.c.l.b16 %v338
        %v467 = vunpack.c.l.b16 %v339
        %v468 = vunpack.c.l.b16 %v340
        %v469 = vunpack.c.l.b16 %v341
        %v470 = vunpack.c.l.b16 %v342
        %v471 = vunpack.c.l.b16 %v343
        %v472 = vunpack.c.l.b16 %v344
        %v473 = vunpack.c.l.b16 %v345
        %v474 = vpack.c.b16 %v459, %v458
        %v475 = vpack.c.b16 %v461, %v460
        %v476 = vpack.c.b16 %v463, %v462
        %v477 = vpack.c.b16 %v465, %v464
        %v478 = vpack.c.b16 %v467, %v466
        %v479 = vpack.c.b16 %v469, %v468
        %v480 = vpack.c.b16 %v471, %v470
        %v481 = vpack.c.b16 %v473, %v472
        %490 = vmatprep.subr.bf16.mxu0 0
        %491 = vmatpush1.bf16.msra.mxu0 %v474
        %492 = vmatprep.subr.bf16.mxu0 0
        %493 = vmatpush1.bf16.msra.mxu0 %v475
        %494 = vmatprep.subr.bf16.mxu0 0
        %495 = vmatpush1.bf16.msra.mxu0 %v476
        %496 = vmatprep.subr.bf16.mxu0 0
        %497 = vmatpush1.bf16.msra.mxu0 %v477
        %498 = vmatprep.subr.bf16.mxu0 0
        %499 = vmatpush1.bf16.msra.mxu0 %v478
        %500 = vmatprep.subr.bf16.mxu0 0
        %501 = vmatpush1.bf16.msra.mxu0 %v479
        %502 = vmatprep.subr.bf16.mxu0 0
        %503 = vmatpush1.bf16.msra.mxu0 %v480
        %504 = vmatprep.subr.bf16.mxu0 0
        %505 = vmatpush1.bf16.msra.mxu0 %v481
        %506 = vmatprep.subr.bf16.mxu0 0
        %507 = vmatpush1.bf16.msra.mxu0 0
        %508 = vmatprep.subr.bf16.mxu0 0
        %509 = vmatpush1.bf16.msra.mxu0 0
        %510 = vmatprep.subr.bf16.mxu0 0
        %511 = vmatpush1.bf16.msra.mxu0 0
        %512 = vmatprep.subr.bf16.mxu0 0
        %513 = vmatpush1.bf16.msra.mxu0 0
        %514 = vmatprep.subr.bf16.mxu0 0
        %515 = vmatpush1.bf16.msra.mxu0 0
        %516 = vmatprep.subr.bf16.mxu0 0
        %517 = vmatpush1.bf16.msra.mxu0 0
        %518 = vmatprep.subr.bf16.mxu0 0
        %519 = vmatpush1.bf16.msra.mxu0 0
        %520 = vmatprep.subr.bf16.mxu0 0
        %521 = vmatpush1.bf16.msra.mxu0 0
        %522 = vmatprep.mubr.bf16.mxu0 0
        %523 = vmatmul.mubr.bf16.gmra.mrb[0].mxu0 %v410
        %v524 = vpop.f32.mrb[0].mxu0
        %v525 = vadd.f32 0.0, %v524
        %v526 = vpop.f32.mrb[0].mxu0
        %v527 = vpop.f32.mrb[0].mxu0
        %v528 = vadd.f32 0.0, %v527
        %v529 = vpop.f32.mrb[0].mxu0
        %530 = vmatprep.mubr.bf16.mxu0 0
        %531 = vmatmul.mubr.bf16.gmra.mrb[0].mxu0 %v411
        %v532 = vpop.f32.mrb[0].mxu0
        %v533 = vadd.f32 0.0, %v532
        %v534 = vpop.f32.mrb[0].mxu0
        %v535 = vpop.f32.mrb[0].mxu0
        %v536 = vadd.f32 0.0, %v535
        %v537 = vpop.f32.mrb[0].mxu0
        %538 = vmatprep.mubr.bf16.mxu0 0
        %539 = vmatmul.mubr.bf16.gmra.mrb[0].mxu0 %v412
        %v540 = vpop.f32.mrb[0].mxu0
        %v541 = vadd.f32 0.0, %v540
        %v542 = vpop.f32.mrb[0].mxu0
        %v543 = vpop.f32.mrb[0].mxu0
        %v544 = vadd.f32 0.0, %v543
        %v545 = vpop.f32.mrb[0].mxu0
        %546 = vmatprep.mubr.bf16.mxu0 0
        %547 = vmatmul.mubr.bf16.gmra.mrb[0].mxu0 %v413
        %v548 = vpop.f32.mrb[0].mxu0
        %v549 = vadd.f32 0.0, %v548
        %v550 = vpop.f32.mrb[0].mxu0
        %v551 = vpop.f32.mrb[0].mxu0
        %v552 = vadd.f32 0.0, %v551
        %v553 = vpop.f32.mrb[0].mxu0
        %554 = vmatprep.mubr.bf16.mxu0 0
        %555 = vmatmul.mubr.bf16.gmra.mrb[0].mxu0 %v414
        %v556 = vpop.f32.mrb[0].mxu0
        %v557 = vadd.f32 0.0, %v556
        %v558 = vpop.f32.mrb[0].mxu0
        %v559 = vpop.f32.mrb[0].mxu0
        %v560 = vadd.f32 0.0, %v559
        %v561 = vpop.f32.mrb[0].mxu0
        %562 = vmatprep.mubr.bf16.mxu0 0
        %563 = vmatmul.mubr.bf16.gmra.mrb[0].mxu0 %v415
        %v564 = vpop.f32.mrb[0].mxu0
        %v565 = vadd.f32 0.0, %v564
        %v566 = vpop.f32.mrb[0].mxu0
        %v567 = vpop.f32.mrb[0].mxu0
        %v568 = vadd.f32 0.0, %v567
        %v569 = vpop.f32.mrb[0].mxu0
        %570 = vmatprep.mubr.bf16.mxu0 0
        %571 = vmatmul.mubr.bf16.gmra.mrb[0].mxu0 %v416
        %v572 = vpop.f32.mrb[0].mxu0
        %v573 = vadd.f32 0.0, %v572
        %v574 = vpop.f32.mrb[0].mxu0
        %v575 = vpop.f32.mrb[0].mxu0
        %v576 = vadd.f32 0.0, %v575
        %v577 = vpop.f32.mrb[0].mxu0
        %578 = vmatprep.mubr.bf16.mxu0 0
        %579 = vmatmul.mubr.bf16.gmra.mrb[0].mxu0 %v417
        %v580 = vpop.f32.mrb[0].mxu0
        %v581 = vadd.f32 0.0, %v580
        %v582 = vpop.f32.mrb[0].mxu0
        %v583 = vpop.f32.mrb[0].mxu0
        %v584 = vadd.f32 0.0, %v583
        %v585 = vpop.f32.mrb[0].mxu0
        %586 = vmatprep.mubr.bf16.mxu0 0
        %587 = vmatmul.mubr.bf16.gmra.mrb[0].mxu0 %v418
        %v588 = vpop.f32.mrb[0].mxu0
        %v589 = vadd.f32 0.0, %v588
        %v590 = vpop.f32.mrb[0].mxu0
        %v591 = vpop.f32.mrb[0].mxu0
        %v592 = vadd.f32 0.0, %v591
        %v593 = vpop.f32.mrb[0].mxu0
        %594 = vmatprep.mubr.bf16.mxu0 0
        %595 = vmatmul.mubr.bf16.gmra.mrb[0].mxu0 %v419
        %v596 = vpop.f32.mrb[0].mxu0
        %v597 = vadd.f32 0.0, %v596
        %v598 = vpop.f32.mrb[0].mxu0
        %v599 = vpop.f32.mrb[0].mxu0
        %v600 = vadd.f32 0.0, %v599
        %v601 = vpop.f32.mrb[0].mxu0
        %602 = vmatprep.mubr.bf16.mxu0 0
        %603 = vmatmul.mubr.bf16.gmra.mrb[0].mxu0 %v420
        %v604 = vpop.f32.mrb[0].mxu0
        %v605 = vadd.f32 0.0, %v604
        %v606 = vpop.f32.mrb[0].mxu0
        %v607 = vpop.f32.mrb[0].mxu0
        %v608 = vadd.f32 0.0, %v607
        %v609 = vpop.f32.mrb[0].mxu0
        %610 = vmatprep.mubr.bf16.mxu0 0
        %611 = vmatmul.mubr.bf16.gmra.mrb[0].mxu0 %v421
        %v612 = vpop.f32.mrb[0].mxu0
        %v613 = vadd.f32 0.0, %v612
        %v614 = vpop.f32.mrb[0].mxu0
        %v615 = vpop.f32.mrb[0].mxu0
        %v616 = vadd.f32 0.0, %v615
        %v617 = vpop.f32.mrb[0].mxu0
        %618 = vmatprep.mubr.bf16.mxu0 0
        %619 = vmatmul.mubr.bf16.gmra.mrb[0].mxu0 %v422
        %v620 = vpop.f32.mrb[0].mxu0
        %v621 = vadd.f32 0.0, %v620
        %v622 = vpop.f32.mrb[0].mxu0
        %v623 = vpop.f32.mrb[0].mxu0
        %v624 = vadd.f32 0.0, %v623
        %v625 = vpop.f32.mrb[0].mxu0
        %626 = vmatprep.mubr.bf16.mxu0 0
        %627 = vmatmul.mubr.bf16.gmra.mrb[0].mxu0 %v423
        %v628 = vpop.f32.mrb[0].mxu0
        %v629 = vadd.f32 0.0, %v628
        %v630 = vpop.f32.mrb[0].mxu0
        %v631 = vpop.f32.mrb[0].mxu0
        %v632 = vadd.f32 0.0, %v631
        %v633 = vpop.f32.mrb[0].mxu0
        %634 = vmatprep.mubr.bf16.mxu0 0
        %635 = vmatmul.mubr.bf16.gmra.mrb[0].mxu0 %v424
        %v636 = vpop.f32.mrb[0].mxu0
        %v637 = vadd.f32 0.0, %v636
        %v638 = vpop.f32.mrb[0].mxu0
        %v639 = vpop.f32.mrb[0].mxu0
        %v640 = vadd.f32 0.0, %v639
        %v641 = vpop.f32.mrb[0].mxu0
        %642 = vmatprep.mubr.bf16.mxu0 0
        %643 = vmatmul.mubr.bf16.gmra.mrb[0].mxu0 %v425
        %v644 = vpop.f32.mrb[0].mxu0
        %v645 = vadd.f32 0.0, %v644
        %v646 = vpop.f32.mrb[0].mxu0
        %v647 = vpop.f32.mrb[0].mxu0
        %v648 = vadd.f32 0.0, %v647
        %v649 = vpop.f32.mrb[0].mxu0
        %650 = vdwg.mxu0
        %v651 = vld [vmem:[%s292] sm:$0x1]
        %v653 = vlaneseq
        %v654 = vshrl.u32 %v653, 7
        %v655 = vsub.s32 0, %v654
        %v656 = vrot.slane %v651, %v655
        %v658 = vmul.f32 %v525, %v656
        %v659 = vmul.f32 %v528, %v656
        %v660 = vmul.f32 %v533, %v656
        %v661 = vmul.f32 %v536, %v656
        %v662 = vmul.f32 %v541, %v656
        %v663 = vmul.f32 %v544, %v656
        %v664 = vmul.f32 %v549, %v656
        %v665 = vmul.f32 %v552, %v656
        %v666 = vmul.f32 %v557, %v656
        %v667 = vmul.f32 %v560, %v656
        %v668 = vmul.f32 %v565, %v656
        %v669 = vmul.f32 %v568, %v656
        %v670 = vmul.f32 %v573, %v656
        %v671 = vmul.f32 %v576, %v656
        %v672 = vmul.f32 %v581, %v656
        %v673 = vmul.f32 %v584, %v656
        %v674 = vmul.f32 %v589, %v656
        %v675 = vmul.f32 %v592, %v656
        %v676 = vmul.f32 %v597, %v656
        %v677 = vmul.f32 %v600, %v656
        %v678 = vmul.f32 %v605, %v656
        %v679 = vmul.f32 %v608, %v656
        %v680 = vmul.f32 %v613, %v656
        %v681 = vmul.f32 %v616, %v656
        %v682 = vmul.f32 %v621, %v656
        %v683 = vmul.f32 %v624, %v656
        %v684 = vmul.f32 %v629, %v656
        %v685 = vmul.f32 %v632, %v656
        %v686 = vmul.f32 %v637, %v656
        %v687 = vmul.f32 %v640, %v656
        %v688 = vmul.f32 %v645, %v656
        %v689 = vmul.f32 %v648, %v656
        %v690 = vld [vmem:[%s295] sm:$0x1]
        %v692 = vlaneseq
        %v693 = vshrl.u32 %v692, 7
        %v694 = vsub.s32 0, %v693
        %v695 = vrot.slane %v690, %v694
        %v697 = vadd.f32 %v658, %v695
        %v698 = vadd.f32 %v659, %v695
        %v699 = vadd.f32 %v660, %v695
        %v700 = vadd.f32 %v661, %v695
        %v701 = vadd.f32 %v662, %v695
        %v702 = vadd.f32 %v663, %v695
        %v703 = vadd.f32 %v664, %v695
        %v704 = vadd.f32 %v665, %v695
        %v705 = vadd.f32 %v666, %v695
        %v706 = vadd.f32 %v667, %v695
        %v707 = vadd.f32 %v668, %v695
        %v708 = vadd.f32 %v669, %v695
        %v709 = vadd.f32 %v670, %v695
        %v710 = vadd.f32 %v671, %v695
        %v711 = vadd.f32 %v672, %v695
        %v712 = vadd.f32 %v673, %v695
        %v713 = vadd.f32 %v674, %v695
        %v714 = vadd.f32 %v675, %v695
        %v715 = vadd.f32 %v676, %v695
        %v716 = vadd.f32 %v677, %v695
        %v717 = vadd.f32 %v678, %v695
        %v718 = vadd.f32 %v679, %v695
        %v719 = vadd.f32 %v680, %v695
        %v720 = vadd.f32 %v681, %v695
        %v721 = vadd.f32 %v682, %v695
        %v722 = vadd.f32 %v683, %v695
        %v723 = vadd.f32 %v684, %v695
        %v724 = vadd.f32 %v685, %v695
        %v725 = vadd.f32 %v686, %v695
        %v726 = vadd.f32 %v687, %v695
        %v727 = vadd.f32 %v688, %v695
        %v728 = vadd.f32 %v689, %v695
        %v729 = vmax.f32 %v697, 0.0
        %v730 = vmax.f32 %v698, 0.0
        %v731 = vmax.f32 %v699, 0.0
        %v732 = vmax.f32 %v700, 0.0
        %v733 = vmax.f32 %v701, 0.0
        %v734 = vmax.f32 %v702, 0.0
        %v735 = vmax.f32 %v703, 0.0
        %v736 = vmax.f32 %v704, 0.0
        %v737 = vmax.f32 %v705, 0.0
        %v738 = vmax.f32 %v706, 0.0
        %v739 = vmax.f32 %v707, 0.0
        %v740 = vmax.f32 %v708, 0.0
        %v741 = vmax.f32 %v709, 0.0
        %v742 = vmax.f32 %v710, 0.0
        %v743 = vmax.f32 %v711, 0.0
        %v744 = vmax.f32 %v712, 0.0
        %v745 = vmax.f32 %v713, 0.0
        %v746 = vmax.f32 %v714, 0.0
        %v747 = vmax.f32 %v715, 0.0
        %v748 = vmax.f32 %v716, 0.0
        %v749 = vmax.f32 %v717, 0.0
        %v750 = vmax.f32 %v718, 0.0
        %v751 = vmax.f32 %v719, 0.0
        %v752 = vmax.f32 %v720, 0.0
        %v753 = vmax.f32 %v721, 0.0
        %v754 = vmax.f32 %v722, 0.0
        %v755 = vmax.f32 %v723, 0.0
        %v756 = vmax.f32 %v724, 0.0
        %v757 = vmax.f32 %v725, 0.0
        %v758 = vmax.f32 %v726, 0.0
        %v759 = vmax.f32 %v727, 0.0
        %v760 = vmax.f32 %v728, 0.0
        %v761 = vpack.c.bf16 %v730, %v729
        %v762 = vpack.c.bf16 %v732, %v731
        %v763 = vpack.c.bf16 %v734, %v733
        %v764 = vpack.c.bf16 %v736, %v735
        %v765 = vpack.c.bf16 %v738, %v737
        %v766 = vpack.c.bf16 %v740, %v739
        %v767 = vpack.c.bf16 %v742, %v741
        %v768 = vpack.c.bf16 %v744, %v743
        %v769 = vpack.c.bf16 %v746, %v745
        %v770 = vpack.c.bf16 %v748, %v747
        %v771 = vpack.c.bf16 %v750, %v749
        %v772 = vpack.c.bf16 %v752, %v751
        %v773 = vpack.c.bf16 %v754, %v753
        %v774 = vpack.c.bf16 %v756, %v755
        %v775 = vpack.c.bf16 %v758, %v757
        %v776 = vpack.c.bf16 %v760, %v759
        %v793 = vunpack.c.l.b16 %v761
        %v794 = vunpack.c.h.b16 %v761
        %v795 = vunpack.c.l.b16 %v762
        %v796 = vunpack.c.h.b16 %v762
        %v797 = vunpack.c.l.b16 %v763
        %v798 = vunpack.c.h.b16 %v763
        %v799 = vunpack.c.l.b16 %v764
        %v800 = vunpack.c.h.b16 %v764
        %v801 = vunpack.c.l.b16 %v765
        %v802 = vunpack.c.h.b16 %v765
        %v803 = vunpack.c.l.b16 %v766
        %v804 = vunpack.c.h.b16 %v766
        %v805 = vunpack.c.l.b16 %v767
        %v806 = vunpack.c.h.b16 %v767
        %v807 = vunpack.c.l.b16 %v768
        %v808 = vunpack.c.h.b16 %v768
        %v809 = vunpack.c.l.b16 %v769
        %v810 = vunpack.c.h.b16 %v769
        %v811 = vunpack.c.l.b16 %v770
        %v812 = vunpack.c.h.b16 %v770
        %v813 = vunpack.c.l.b16 %v771
        %v814 = vunpack.c.h.b16 %v771
        %v815 = vunpack.c.l.b16 %v772
        %v816 = vunpack.c.h.b16 %v772
        %v817 = vunpack.c.l.b16 %v773
        %v818 = vunpack.c.h.b16 %v773
        %v819 = vunpack.c.l.b16 %v774
        %v820 = vunpack.c.h.b16 %v774
        %v821 = vunpack.c.l.b16 %v775
        %v822 = vunpack.c.h.b16 %v775
        %v823 = vunpack.c.l.b16 %v776
        %v824 = vunpack.c.h.b16 %v776
        %v825 = vpack.c.b16 %v793, %v793
        %v826 = vpack.c.b16 %v794, %v794
        %v827 = vpack.c.b16 %v795, %v795
        %v828 = vpack.c.b16 %v796, %v796
        %v829 = vpack.c.b16 %v797, %v797
        %v830 = vpack.c.b16 %v798, %v798
        %v831 = vpack.c.b16 %v799, %v799
        %v832 = vpack.c.b16 %v800, %v800
        %v833 = vpack.c.b16 %v801, %v801
        %v834 = vpack.c.b16 %v802, %v802
        %v835 = vpack.c.b16 %v803, %v803
        %v836 = vpack.c.b16 %v804, %v804
        %v837 = vpack.c.b16 %v805, %v805
        %v838 = vpack.c.b16 %v806, %v806
        %v839 = vpack.c.b16 %v807, %v807
        %v840 = vpack.c.b16 %v808, %v808
        %v841 = vpack.c.b16 %v809, %v809
        %v842 = vpack.c.b16 %v810, %v810
        %v843 = vpack.c.b16 %v811, %v811
        %v844 = vpack.c.b16 %v812, %v812
        %v845 = vpack.c.b16 %v813, %v813
        %v846 = vpack.c.b16 %v814, %v814
        %v847 = vpack.c.b16 %v815, %v815
        %v848 = vpack.c.b16 %v816, %v816
        %v849 = vpack.c.b16 %v817, %v817
        %v850 = vpack.c.b16 %v818, %v818
        %v851 = vpack.c.b16 %v819, %v819
        %v852 = vpack.c.b16 %v820, %v820
        %v853 = vpack.c.b16 %v821, %v821
        %v854 = vpack.c.b16 %v822, %v822
        %v855 = vpack.c.b16 %v823, %v823
        %v856 = vpack.c.b16 %v824, %v824
        %889 = vst [vmem:[%s287] sm:$0xf] %v825
        %890 = vst [vmem:[%s287 + $0x4] sm:$0xf] %v826
        %891 = vst [vmem:[%s287 + $0x8] sm:$0xf] %v827
        %892 = vst [vmem:[%s287 + $0xc] sm:$0xf] %v828
        %893 = vst [vmem:[%s287 + $0x10] sm:$0xf] %v829
        %894 = vst [vmem:[%s287 + $0x14] sm:$0xf] %v830
        %895 = vst [vmem:[%s287 + $0x18] sm:$0xf] %v831
        %896 = vst [vmem:[%s287 + $0x1c] sm:$0xf] %v832
        %897 = vst [vmem:[%s287 + $0x20] sm:$0xf] %v833
        %898 = vst [vmem:[%s287 + $0x24] sm:$0xf] %v834
        %899 = vst [vmem:[%s287 + $0x28] sm:$0xf] %v835
        %900 = vst [vmem:[%s287 + $0x2c] sm:$0xf] %v836
        %901 = vst [vmem:[%s287 + $0x30] sm:$0xf] %v837
        %902 = vst [vmem:[%s287 + $0x34] sm:$0xf] %v838
        %903 = vst [vmem:[%s287 + $0x38] sm:$0xf] %v839
        %904 = vst [vmem:[%s287 + $0x3c] sm:$0xf] %v840
        %905 = vst [vmem:[%s287 + $0x40] sm:$0xf] %v841
        %906 = vst [vmem:[%s287 + $0x44] sm:$0xf] %v842
        %907 = vst [vmem:[%s287 + $0x48] sm:$0xf] %v843
        %908 = vst [vmem:[%s287 + $0x4c] sm:$0xf] %v844
        %909 = vst [vmem:[%s287 + $0x50] sm:$0xf] %v845
        %910 = vst [vmem:[%s287 + $0x54] sm:$0xf] %v846
        %911 = vst [vmem:[%s287 + $0x58] sm:$0xf] %v847
        %912 = vst [vmem:[%s287 + $0x5c] sm:$0xf] %v848
        %913 = vst [vmem:[%s287 + $0x60] sm:$0xf] %v849
        %914 = vst [vmem:[%s287 + $0x64] sm:$0xf] %v850
        %915 = vst [vmem:[%s287 + $0x68] sm:$0xf] %v851
        %916 = vst [vmem:[%s287 + $0x6c] sm:$0xf] %v852
        %917 = vst [vmem:[%s287 + $0x70] sm:$0xf] %v853
        %918 = vst [vmem:[%s287 + $0x74] sm:$0xf] %v854
        %919 = vst [vmem:[%s287 + $0x78] sm:$0xf] %v855
        %920 = vst [vmem:[%s287 + $0x7c] sm:$0xf] %v856
        %s921 = sand.u32 %s159, 1
        %s922 = scalar_lea.sflag [#allocation4], %s921
        %s923 = sand.u32 %s159, 1
        %s924 = smul.addr %s923, 128
        %s925 = scalar_lea.vmem [#allocation7], %s924
        // Predicated region
        $region45: #{tpu_custom_call.1} parent=35 // pred_check
          %p926 = pneg %p169
        $region46: #{tpu_custom_call.1} parent=35 // pred_check_branch
          %928 = sbr.rel (%p926) target = $region48
        $region47: #{tpu_custom_call.1} parent=35 // pred_region
          %s929 = smul.u32 32, %s27
          %s931 = ssub.s32 2048, 2048
          %932 = vsyncadd %s922, %s931
          %s933 = sadd.s32 %s28, %s929
          %s934 = smul.addr %s933, 64
          %s935 = scalar_lea.hbm %s4, %s934
          %s936 = sshll.u32 %s925, 4
          %s937 = int_to_ptr.vmem [resolvable:$true] %s936
          %942 = dma.vmem_to_hbm [thread:$0]  %s937, 2048, %s935, %s922, 64, 64, 4
        $region48: #{tpu_custom_call.1} parent=35 // pred_fallthru
          _
      $region36: #{tpu_custom_call.1} parent=5 // pred_fallthru
        _
      %p943 = scmp.le.s32.totalorder 2, %s17
      // Predicated region
      $region49: #{tpu_custom_call.1} parent=5 // pred_check
        %p944 = pneg %p943
      $region50: #{tpu_custom_call.1} parent=5 // pred_check_branch
        %946 = sbr.rel (%p944) target = $region52
      $region51: #{tpu_custom_call.1} parent=5 // pred_region
        %s947 = ssub.s32 %s17, 2
        // Predicated region
        $region53: #{tpu_custom_call.1} parent=51 // pred_check
          %p948 = pneg %p175
        $region54: #{tpu_custom_call.1} parent=51 // pred_check_branch
          %950 = sbr.rel (%p948) target = $region56
        $region55: #{tpu_custom_call.1} parent=51 // pred_region
          %s951 = sand.u32 %s160, 1
          %s952 = scalar_lea.sflag [#allocation4], %s951
          %s953 = sand.u32 %s160, 1
          %s954 = smul.addr %s953, 128
          %s955 = scalar_lea.vmem [#allocation7], %s954
          %956 = dma.done %s952, 2048
        $region56: #{tpu_custom_call.1} parent=51 // pred_fallthru
          _
      $region52: #{tpu_custom_call.1} parent=5 // pred_fallthru
        _
    $region6: #{tpu_custom_call.1} parent=1 // loop_footer
      %s21 = sadd.s32 1, %s17
    $region7: #{tpu_custom_call.1} parent=1 // loop_footer_branch
      %16 = sbr.rel target = $region3
    $region8: #{tpu_custom_call.1} parent=1 // loop_exit
      _
    %957 = vsyncpa [#allocation3], 1
    %s958 = scalar_lea.sflag [#allocation3], 1
    %959 = vsyncpa %s958, 1
    %960 = vsyncpa [#allocation6], 1
    %961 = vsyncpa [#allocation4], 1
    %s962 = scalar_lea.sflag [#allocation4], 1
    %963 = vsyncpa %s962, 1

</llo_original>
